<compile_context>
chip_gen: v5e
topology: v5e:2x2
jax: 0.10.0
libtpu: 0.0.40
codegen_flags: <defaults>
</compile_context>

<pallas_src>
import functools

import jax
import jax.numpy as jnp
from jax.experimental import pallas as pl
from jax.experimental.pallas import tpu as pltpu

_TARGET_BLOCK_ELEMS = (4 * 1024 * 1024) // 4   # ~4 MiB of f32 per input block


def _msle_kernel(x_ref, y_ref, o_ref, acc_ref, *,
                 rows, tile_rows, cols, need_mask):
    s = pl.program_id(0)
    nsteps = pl.num_programs(0)

    @pl.when(s == 0)
    def _():
        acc_ref[...] = jnp.zeros_like(acc_ref)

    def accumulate(mask_tail):
        x = x_ref[...].astype(jnp.float32)
        y = y_ref[...].astype(jnp.float32)
        d = jnp.log1p(x) - jnp.log1p(y)          # log(x+1) - log(y+1)
        sq = d * d
        if mask_tail:
            # Rows past the real data in the partial last block hold garbage
            # read out of bounds; drop their contribution (select, so even a
            # NaN produced by log1p(garbage) is discarded, never multiplied).
            row_ids = s * tile_rows + jax.lax.broadcasted_iota(
                jnp.int32, sq.shape, 0)
            sq = jnp.where(row_ids < rows, sq, 0.0)
        # Fold the block into the vreg-scale (8, cols) accumulator: pure VPU
        # vreg adds (reduction over the leading, non-layout axis), no
        # block-sized accumulator writeback.
        acc_ref[...] += jnp.sum(sq.reshape(tile_rows // 8, 8, cols), axis=0)

    if need_mask:
        @pl.when(s != nsteps - 1)
        def _():
            accumulate(False)

        @pl.when(s == nsteps - 1)
        def _():
            accumulate(True)
    else:
        accumulate(False)

    @pl.when(s == nsteps - 1)
    def _():
        total = jnp.sum(acc_ref[...])            # tiny XLU reduce, epilogue only
        o_ref[...] = jnp.full(o_ref.shape, total, dtype=o_ref.dtype)


def _choose_tiling(n):
    """Pick a lane-dense 2-D view (rows, cols) and ~4 MiB row-tiles for n elems."""
    cols = None
    for c in (512, 256, 128):
        if n % c == 0 and n // c >= 8:
            cols = c
            break
    if cols is None:
        cols = 128                               # needs a (cheap) flat pad
    rows = max(8, -(-n // cols))                 # at least one aligned 8-row tile
    pad = rows * cols - n
    max_tile_rows = max(8, (_TARGET_BLOCK_ELEMS // cols) // 8 * 8)
    tile_rows = min(max_tile_rows, (rows // 8) * 8)
    num_tiles = -(-rows // tile_rows)
    return cols, pad, rows, tile_rows, num_tiles


@jax.jit
def msle_loss(x, y):
    assert x.shape == y.shape, "input and target must have the same shape"
    n = x.size

    cols, pad, rows, tile_rows, num_tiles = _choose_tiling(n)

    xf = x.reshape(-1)
    yf = y.reshape(-1)
    if pad:
        # TODO(synk): only hit when numel % 128 != 0 (or numel < 1024); costs one
        # extra HBM copy.  Padded zeros are safe: log1p(0) - log1p(0) == 0.
        xf = jnp.pad(xf, (0, pad))
        yf = jnp.pad(yf, (0, pad))
    x2 = xf.reshape(rows, cols)
    y2 = yf.reshape(rows, cols)

    need_mask = (num_tiles * tile_rows) != rows

    kernel = functools.partial(
        _msle_kernel,
        rows=rows, tile_rows=tile_rows, cols=cols, need_mask=need_mask)

    bytes_in = n * (jnp.dtype(x.dtype).itemsize + jnp.dtype(y.dtype).itemsize)
    cost = pl.CostEstimate(
        flops=4 * n,
        transcendentals=2 * n,
        bytes_accessed=bytes_in + 8 * 128 * 4)

    partial_sum = pl.pallas_call(
        kernel,
        out_shape=jax.ShapeDtypeStruct((8, 128), jnp.float32),
        grid_spec=pltpu.PrefetchScalarGridSpec(
            num_scalar_prefetch=0,
            grid=(num_tiles,),
            in_specs=[
                pl.BlockSpec((tile_rows, cols), lambda s: (s, 0)),
                pl.BlockSpec((tile_rows, cols), lambda s: (s, 0)),
            ],
            out_specs=pl.BlockSpec((8, 128), lambda s: (0, 0)),
            scratch_shapes=[pltpu.VMEM((8, cols), jnp.float32)],
        ),
        compiler_params=pltpu.CompilerParams(
            dimension_semantics=("arbitrary",),
            vmem_limit_bytes=32 * 1024 * 1024,
        ),
        cost_estimate=cost,
    )(x2, y2)

    # TODO(synk): on v7x, shard the reduction across the two TensorCores with a
    # leading CORE_PARALLEL axis (or pl.core_map); single-core streaming here.
    return partial_sum[0, 0] / n


if __name__ == "__main__":
    key = jax.random.PRNGKey(0)
    k1, k2 = jax.random.split(key)
    # MSLELoss has no parameters; only (input, target) tensors.
    # Use non-negative values so torch.log(input + 1) would be finite too.
    shape = (2, 4, 16, 16)
    x = jax.random.uniform(k1, shape, dtype=jnp.float32, minval=0.0, maxval=3.0)
    y = jax.random.uniform(k2, shape, dtype=jnp.float32, minval=0.0, maxval=3.0)

    loss = msle_loss(x, y)
    jax.block_until_ready(loss)

    # Reference check in plain JAX.
    ref = jnp.mean((jnp.log1p(x) - jnp.log1p(y)) ** 2)
    assert jnp.allclose(loss, ref, rtol=1e-5, atol=1e-6), (loss, ref)

    print("KERNEL_OK")
</pallas_src>

<mosaic_0001>
module attributes {stable_mosaic.version = 11 : i64} {
  func.func @_msle_kernel(%arg0: i32, %arg1: memref<8x256xf32, #tpu.memory_space<vmem>>, %arg2: memref<8x256xf32, #tpu.memory_space<vmem>>, %arg3: memref<8x128xf32, #tpu.memory_space<vmem>>, %arg4: memref<8x256xf32, #tpu.memory_space<vmem>>) attributes {dimension_semantics = [#tpu.dimension_semantics<arbitrary>], iteration_bounds = array<i64: 1>, scalar_prefetch = 0 : i64, scratch_operands = 1 : i64, tpu.core_type = #tpu.core_type<tc>, window_params = [{transform_indices = @transform_0, window_bounds = array<i64: 8, 256>}, {transform_indices = @transform_1, window_bounds = array<i64: 8, 256>}, {pipeline_mode = #tpu.pipeline_mode<synchronous>, transform_indices = @transform_2, window_bounds = array<i64: 8, 128>}]} {
    %c0_i32 = arith.constant 0 : i32
    %0 = arith.cmpi eq, %arg0, %c0_i32 : i32
    %1 = arith.extui %0 : i1 to i32
    %c0_i32_0 = arith.constant 0 : i32
    %2 = arith.cmpi ne, %1, %c0_i32_0 : i32
    scf.if %2 {
      %cst_10 = arith.constant 0.000000e+00 : f32
      %17 = vector.broadcast %cst_10 : f32 to vector<8x256xf32>
      %c0_11 = arith.constant 0 : index
      %c0_12 = arith.constant 0 : index
      %18 = vector.load %arg4[%c0_11, %c0_12] : memref<8x256xf32, #tpu.memory_space<vmem>>, vector<8x256xf32>
      tpu.vector_store %arg4[%c0_11, %c0_12], %17 {strides = array<i32>} : memref<8x256xf32, #tpu.memory_space<vmem>>, vector<8x256xf32>,
    } else {
    }
    %c0 = arith.constant 0 : index
    %c0_1 = arith.constant 0 : index
    %3 = vector.load %arg1[%c0, %c0_1] : memref<8x256xf32, #tpu.memory_space<vmem>>, vector<8x256xf32>
    %c0_2 = arith.constant 0 : index
    %c0_3 = arith.constant 0 : index
    %4 = vector.load %arg2[%c0_2, %c0_3] : memref<8x256xf32, #tpu.memory_space<vmem>>, vector<8x256xf32>
    %5 = math.log1p %3 : vector<8x256xf32>
    %6 = math.log1p %4 : vector<8x256xf32>
    %7 = arith.subf %5, %6 : vector<8x256xf32>
    %8 = arith.mulf %7, %7 : vector<8x256xf32>
    %c0_4 = arith.constant 0 : index
    %c0_5 = arith.constant 0 : index
    %9 = vector.load %arg4[%c0_4, %c0_5] : memref<8x256xf32, #tpu.memory_space<vmem>>, vector<8x256xf32>
    %10 = vector.shape_cast %8 : vector<8x256xf32> to vector<1x8x256xf32>
    %cst = arith.constant dense<0.000000e+00> : vector<8x256xf32>
    %11 = vector.multi_reduction <add>, %10, %cst [0] : vector<1x8x256xf32> to vector<8x256xf32>
    %12 = arith.addf %9, %11 : vector<8x256xf32>
    %c0_6 = arith.constant 0 : index
    %c0_7 = arith.constant 0 : index
    %13 = vector.load %arg4[%c0_6, %c0_7] : memref<8x256xf32, #tpu.memory_space<vmem>>, vector<8x256xf32>
    tpu.vector_store %arg4[%c0_6, %c0_7], %12 {strides = array<i32>} : memref<8x256xf32, #tpu.memory_space<vmem>>, vector<8x256xf32>,
    %c0_i32_8 = arith.constant 0 : i32
    %14 = arith.cmpi eq, %arg0, %c0_i32_8 : i32
    %15 = arith.extui %14 : i1 to i32
    %c0_i32_9 = arith.constant 0 : i32
    %16 = arith.cmpi ne, %15, %c0_i32_9 : i32
    scf.if %16 {
      %c0_10 = arith.constant 0 : index
      %c0_11 = arith.constant 0 : index
      %17 = vector.load %arg4[%c0_10, %c0_11] : memref<8x256xf32, #tpu.memory_space<vmem>>, vector<8x256xf32>
      %18 = vector.shape_cast %17 : vector<8x256xf32> to vector<1x8x256xf32>
      %cst_12 = arith.constant dense<0.000000e+00> : vector<1xf32>
      %19 = vector.multi_reduction <add>, %18, %cst_12 [1, 2] : vector<1x8x256xf32> to vector<1xf32>
      %20 = vector.shape_cast %19 : vector<1xf32> to vector<1x1x1xf32>
      %21 = vector.extract %20[0, 0, 0] : f32 from vector<1x1x1xf32>
      %22 = vector.broadcast %21 : f32 to vector<8x128xf32>
      %c0_13 = arith.constant 0 : index
      %c0_14 = arith.constant 0 : index
      %23 = vector.load %arg3[%c0_13, %c0_14] : memref<8x128xf32, #tpu.memory_space<vmem>>, vector<8x128xf32>
      tpu.vector_store %arg3[%c0_13, %c0_14], %22 {strides = array<i32>} : memref<8x128xf32, #tpu.memory_space<vmem>>, vector<8x128xf32>,
    } else {
    }
    return
  }
  func.func @transform_0(%arg0: i32) -> (i32, i32) {
    %c0_i32 = arith.constant 0 : i32
    %c0_i32_0 = arith.constant 0 : i32
    return %arg0, %c0_i32 : i32, i32
  }
  func.func @transform_1(%arg0: i32) -> (i32, i32) {
    %c0_i32 = arith.constant 0 : i32
    %c0_i32_0 = arith.constant 0 : i32
    return %arg0, %c0_i32 : i32, i32
  }
  func.func @transform_2(%arg0: i32) -> (i32, i32) {
    %c0_i32 = arith.constant 0 : i32
    %c0_i32_0 = arith.constant 0 : i32
    %c0_i32_1 = arith.constant 0 : i32
    return %c0_i32, %c0_i32_0 : i32, i32
  }
}

</mosaic_0001>

<llo_original>
// kernel: msle_loss.1
$region0: #{msle_loss.1}
  #allocation0 [shape = 'u32[]', space=smem, size = 0x4, offset = 0x4, fixed_abs, tag = 'smem constant byte address 0x4 - core index']
  #allocation1 [shape = 'u32[72,128]{1,0:T(1,128)}', space=vmem, size = 0x9000, scoped, tag = 'internal scratch']
  #allocation2 [shape = 'f32[8,256]{1,0:T(8,128)}', space=vmem, size = 0x2000, scoped, tag = 'scratch operand']
  %s0 = inlined_call_operand.vmem [shape: f32[8,256], index: 0, kind: input, shape index: {}]
  %s1 = inlined_call_operand.vmem [shape: f32[8,256], index: 1, kind: input, shape index: {}]
  %s2 = inlined_call_operand.vmem [shape: f32[8,128], index: 2, kind: output, shape index: {}]
  %s3 = sld [smem:[#allocation0]]
  $region26: #{msle_loss.1} parent=0
    _
  %s5 = ssub.s32 1, %s3
  %s6 = scalar_select 0, %s5, %s3
  // Predicated region
  $region2: #{msle_loss.1} parent=0 // pred_check
    _
  $region3: #{msle_loss.1} parent=0 // pred_check_branch
    %8 = sbr.rel (0) target = $region5
  $region4: #{msle_loss.1} parent=0 // pred_region
    _
  $region5: #{msle_loss.1} parent=0 // pred_fallthru
    _
  // Predicated region
  $region6: #{msle_loss.1} parent=0 // pred_check
    _
  $region7: #{msle_loss.1} parent=0 // pred_check_branch
    %10 = sbr.rel (0) target = $region9
  $region8: #{msle_loss.1} parent=0 // pred_region
    _
  $region9: #{msle_loss.1} parent=0 // pred_fallthru
    _
  %p11 = scmp.eq.s32.totalorder 0, 0
  // Predicated region
  $region10: #{msle_loss.1} parent=0 // pred_check
    %p12 = pneg %p11
  $region11: #{msle_loss.1} parent=0 // pred_check_branch
    %14 = sbr.rel (%p12) target = $region13
  $region12: #{msle_loss.1} parent=0 // pred_region
    %15 = vst [vmem:[#allocation2] sm:$0xff] 0.0
    %16 = vst [vmem:[#allocation2 + $0x8] sm:$0xff] 0.0
  $region13: #{msle_loss.1} parent=0 // pred_fallthru
    _
  %v17 = vld [vmem:[%s0] sm:$0xff]
  %v18 = vld [vmem:[%s0 + $0x8] sm:$0xff]
  %v19 = vld [vmem:[%s1] sm:$0xff]
  %v20 = vld [vmem:[%s1 + $0x8] sm:$0xff]
  %v21 = vadd.f32 %v17, 1.0
  %v22 = vlog2.pop %v21
  %v23 = vmul.f32 %v22, 0.6931472
  %v24 = vmul.f32 -0.5, %v17
  %v25 = vadd.f32 %v24, 1.0
  %v26 = vmul.f32 %v25, %v17
  %v27 = vand.u32 2147483647, %v17
  %vm28 = vcmp.lt.f32.partialorder %v27, 0.0004427343
  %v29 = vsel %vm28, %v26, %v23
  %v30 = vadd.f32 %v18, 1.0
  %v31 = vlog2.pop %v30
  %v32 = vmul.f32 %v31, 0.6931472
  %v33 = vmul.f32 -0.5, %v18
  %v34 = vadd.f32 %v33, 1.0
  %v35 = vmul.f32 %v34, %v18
  %v36 = vand.u32 2147483647, %v18
  %vm37 = vcmp.lt.f32.partialorder %v36, 0.0004427343
  %v38 = vsel %vm37, %v35, %v32
  %v39 = vadd.f32 %v19, 1.0
  %v40 = vlog2.pop %v39
  %v41 = vmul.f32 %v40, 0.6931472
  %v42 = vmul.f32 -0.5, %v19
  %v43 = vadd.f32 %v42, 1.0
  %v44 = vmul.f32 %v43, %v19
  %v45 = vand.u32 2147483647, %v19
  %vm46 = vcmp.lt.f32.partialorder %v45, 0.0004427343
  %v47 = vsel %vm46, %v44, %v41
  %v48 = vadd.f32 %v20, 1.0
  %v49 = vlog2.pop %v48
  %v50 = vmul.f32 %v49, 0.6931472
  %v51 = vmul.f32 -0.5, %v20
  %v52 = vadd.f32 %v51, 1.0
  %v53 = vmul.f32 %v52, %v20
  %v54 = vand.u32 2147483647, %v20
  %vm55 = vcmp.lt.f32.partialorder %v54, 0.0004427343
  %v56 = vsel %vm55, %v53, %v50
  %v57 = vsub.f32 %v29, %v47
  %v58 = vsub.f32 %v38, %v56
  %v59 = vmul.f32 %v57, %v57
  %v60 = vmul.f32 %v58, %v58
  %v61 = vld [vmem:[#allocation2] sm:$0xff]
  %v62 = vld [vmem:[#allocation2 + $0x8] sm:$0xff]
  %v63 = vadd.f32 %v59, 0.0
  %v64 = vadd.f32 %v60, 0.0
  %v65 = vadd.f32 %v61, %v63
  %v66 = vadd.f32 %v62, %v64
  %67 = vst [vmem:[#allocation2] sm:$0xff] %v65
  %68 = vst [vmem:[#allocation2 + $0x8] sm:$0xff] %v66
  // Predicated region
  $region14: #{msle_loss.1} parent=0 // pred_check
    %p69 = pneg %p11
  $region15: #{msle_loss.1} parent=0 // pred_check_branch
    %71 = sbr.rel (%p69) target = $region17
  $region16: #{msle_loss.1} parent=0 // pred_region
    %v72 = vld [vmem:[#allocation2] sm:$0xff]
    %v73 = vld [vmem:[#allocation2 + $0x8] sm:$0xff]
    %v74 = vadd.f32 %v72, %v73
    %75 = vadd.xlane.f32.xlu0 %v74
    %v76 = vpop.xlane.xlu0 %75
    %v77 = vrot.slane %v76, 4
    %v78 = vadd.f32 %v76, %v77
    %v79 = vrot.slane %v78, 2
    %v80 = vadd.f32 %v78, %v79
    %v81 = vrot.slane %v80, 1
    %v82 = vadd.f32 %v80, %v81
    %s83 = vtos %v82
    %v84 = vstv %s83
    %85 = vst [vmem:[%s2] sm:$0xff] %v84
  $region17: #{msle_loss.1} parent=0 // pred_fallthru
    _
  // Predicated region
  $region18: #{msle_loss.1} parent=0 // pred_check
    _
  $region19: #{msle_loss.1} parent=0 // pred_check_branch
    %87 = sbr.rel (0) target = $region21
  $region20: #{msle_loss.1} parent=0 // pred_region
    _
  $region21: #{msle_loss.1} parent=0 // pred_fallthru
    _
  // Predicated region
  $region22: #{msle_loss.1} parent=0 // pred_check
    _
  $region23: #{msle_loss.1} parent=0 // pred_check_branch
    %89 = sbr.rel (0) target = $region25
  $region24: #{msle_loss.1} parent=0 // pred_region
    _
  $region25: #{msle_loss.1} parent=0 // pred_fallthru
    _

</llo_original>
